<compile_context>
chip_gen: v5e
topology: v5e:2x2
jax: 0.10.0
libtpu: 0.0.40
codegen_flags: <defaults>
</compile_context>

<pallas_src>
import jax
import jax.numpy as jnp
from jax.experimental import pallas as pl
from jax.experimental.pallas import tpu as pltpu


def outconv1d_kernel(x_ref, w_ref, b_ref, o_ref):
    # x_ref: (bblk, C_in, tl)       VMEM
    # w_ref: (co_blk, C_in)         VMEM (resident across the grid)
    # b_ref: (co_blk, 1) float32    VMEM (resident)
    # o_ref: (bblk, co_blk, tl)     VMEM
    w = w_ref[...]
    # Hoist the f32 bias broadcast out of the batch loop: JAX does not CSE
    # broadcast_in_dim, so doing it per-iteration repeats the VPU work.
    bias = jnp.broadcast_to(b_ref[...], (o_ref.shape[1], o_ref.shape[2]))
    nb = x_ref.shape[0]

    def body(i, carry):
        # (co_blk, C_in) x (C_in, tl) MXU matmul with f32 accumulation; the
        # f32 bias is added before the downcast to the output dtype.
        y = jnp.dot(w, x_ref[i], preferred_element_type=jnp.float32)
        o_ref[i] = (y + bias).astype(o_ref.dtype)
        return carry

    # Fully unroll short batch loops (LLO visibility); keep long ones rolled so
    # the f32 (co_blk, tl) temporaries do not blow past the vreg file.
    jax.lax.fori_loop(0, nb, body, 0, unroll=nb <= 8)


def _vmem_limit_bytes():
    # Re-derive the VMEM budget per chip generation (v7x: 64 MiB/TC;
    # v5e/v6e: 128 MiB physical but tiny scoped defaults).
    try:
        cap = pltpu.get_tpu_info().vmem_capacity_bytes
    except Exception:
        cap = 64 * 1024 * 1024
    return max(32 * 1024 * 1024, min(100 * 1024 * 1024, (cap * 3) // 4))


def outconv_1d(x, weight, bias, *, tl=None, bblk=None):
    """Pointwise Conv1d. x: (B, C_in, L); weight: (C_out, C_in, 1); bias: (C_out,)."""
    B, C_in, L = x.shape
    C_out = weight.shape[0]
    itemsize = jnp.dtype(x.dtype).itemsize

    w2d = weight.reshape(C_out, C_in).astype(x.dtype)
    # Bias stays float32: it is added to the f32 accumulator inside the kernel
    # before the final downcast (matches an f32 Conv1d reference).
    b2d = bias.reshape(C_out, 1).astype(jnp.float32)

    vmem_limit = _vmem_limit_bytes()

    # ---- Resident weight/bias budget; C_out tiling only as a fallback ------
    def _resident(co):  # weight + bias, assume double-buffered by the pipeline
        return 2 * (co * C_in * itemsize + co * 4)

    co_blk = C_out
    max_resident = vmem_limit // 4
    if _resident(C_out) > max_resident and C_out >= 16:
        # Weight too large to keep fully resident (matters on v7x's 64 MiB):
        # tile C_out on a (parallel) grid axis; x is re-read per C_out tile,
        # so this path only triggers when it genuinely does not fit.
        per_co = 2 * (C_in * itemsize + 4)
        co_blk = max(8, (max_resident // per_co) // 8 * 8)
        if co_blk >= 256:
            co_blk = (co_blk // 256) * 256          # MXU-friendly on v6e/v7x
        co_blk = min(co_blk, (C_out // 8) * 8)
    n_co = pl.cdiv(C_out, co_blk)

    # ---- VMEM budget for the pipelined x/out tiles --------------------------
    tile_budget = int(vmem_limit * 0.7) - _resident(co_blk)
    tile_budget = max(tile_budget, 2 * 1024 * 1024)

    per_col_pipe = 2 * (C_in + co_blk) * itemsize   # double-buffered x + out, per batch elem
    f32_per_col = 8 * co_blk                        # f32 accumulator + broadcast bias
    hbm_per_col = (C_in + co_blk) * itemsize        # actual HBM bytes per column per batch elem
    step_target = 8 * 1024 * 1024                   # ~8 MiB of HBM traffic per grid step

    # ---- Length tile: lane dense, no wrapper-level padding ------------------
    if tl is None:
        if L < 128:
            # Lane padding to 128 wastes bandwidth in this regime; bblk below
            # compensates by packing many batch elements per step.
            # TODO(synk): for tiny L callers should fold batch into the lane
            # axis (channels-last (C_in, B*L) layout) to fill all 128 lanes.
            tl = L
        else:
            tl_vmem = (tile_budget // max(1, per_col_pipe + f32_per_col)) // 128 * 128
            tl_target = -(-step_target // max(1, hbm_per_col))
            tl_target = ((tl_target + 127) // 128) * 128
            tl = max(128, min(tl_vmem, tl_target, 16384, (L // 128) * 128))
    else:
        tl = L if L < 128 else max(128, min((tl // 128) * 128, (L // 128) * 128))

    # ---- Batch block: amortize the ~0.35 us per-step overhead ---------------
    # No divisibility requirement on B: the batch grid is cdiv-based and the
    # boundary block is masked on store.
    if bblk is None:
        hbm_per_b = max(1, tl * hbm_per_col)
        b_target = -(-step_target // hbm_per_b)
        b_vmem = max(1, (tile_budget - tl * f32_per_col) // max(1, tl * per_col_pipe))
        bblk = int(max(1, min(B, b_target, b_vmem, 1024)))
    bblk = max(1, min(bblk, B))

    n_b = pl.cdiv(B, bblk)
    n_l = pl.cdiv(L, tl)

    # ---- Keep >= 2 parallel grid steps so both v7x TensorCores get work -----
    if n_b * n_l * n_co < 2:
        if B >= 2:
            bblk = -(-B // 2)
            n_b = pl.cdiv(B, bblk)
        elif L >= 256 and tl >= 256:
            tl = max(128, ((tl // 2) // 128) * 128)
            n_l = pl.cdiv(L, tl)

    grid = (n_b, n_l, n_co)   # co innermost: x block index is co-invariant (no re-fetch)

    out = pl.pallas_call(
        outconv1d_kernel,
        out_shape=jax.ShapeDtypeStruct((B, C_out, L), x.dtype),
        grid_spec=pltpu.PrefetchScalarGridSpec(
            num_scalar_prefetch=0,
            grid=grid,
            in_specs=[
                pl.BlockSpec((bblk, C_in, tl), lambda b, l, co: (b, 0, l)),
                pl.BlockSpec((co_blk, C_in), lambda b, l, co: (co, 0)),
                pl.BlockSpec((co_blk, 1), lambda b, l, co: (co, 0)),
            ],
            out_specs=pl.BlockSpec((bblk, co_blk, tl), lambda b, l, co: (b, co, l)),
        ),
        compiler_params=pltpu.CompilerParams(
            dimension_semantics=("parallel", "parallel", "parallel"),
            vmem_limit_bytes=vmem_limit,
        ),
    )(x, w2d, b2d)
    return out


if __name__ == "__main__":
    key = jax.random.PRNGKey(0)
    kx, kw, kb = jax.random.split(key, 3)

    B, C_in, C_out, L = 2, 4, 8, 16

    x = jax.random.normal(kx, (B, C_in, L), dtype=jnp.float32)
    # Deterministic synthetic parameters (Conv1d weight shape: (C_out, C_in, 1)).
    weight = jax.random.normal(kw, (C_out, C_in, 1), dtype=jnp.float32) * 0.1
    bias = jax.random.normal(kb, (C_out,), dtype=jnp.float32) * 0.1

    out = jax.block_until_ready(outconv_1d(x, weight, bias))

    # Reference: kernel_size=1 Conv1d == pointwise matmul + bias.
    ref = jnp.einsum("oc,bcl->bol", weight[:, :, 0], x) + bias[None, :, None]
    assert out.shape == (B, C_out, L)
    assert jnp.allclose(out, ref, atol=1e-5, rtol=1e-5)

    print("KERNEL_OK")
</pallas_src>

<mosaic_0001>
module attributes {stable_mosaic.version = 11 : i64} {
  func.func @outconv1d_kernel(%arg0: i32, %arg1: i32, %arg2: i32, %arg3: memref<1x4x16xf32, #tpu.memory_space<vmem>>, %arg4: memref<8x4xf32, #tpu.memory_space<vmem>>, %arg5: memref<8x1xf32, #tpu.memory_space<vmem>>, %arg6: memref<1x8x16xf32, #tpu.memory_space<vmem>>) attributes {dimension_semantics = [#tpu.dimension_semantics<parallel>, #tpu.dimension_semantics<parallel>, #tpu.dimension_semantics<parallel>], iteration_bounds = array<i64: 2, 1, 1>, scalar_prefetch = 0 : i64, scratch_operands = 0 : i64, tpu.core_type = #tpu.core_type<tc>, window_params = [{transform_indices = @transform_0, window_bounds = array<i64: 1, 4, 16>}, {transform_indices = @transform_1, window_bounds = array<i64: 8, 4>}, {transform_indices = @transform_2, window_bounds = array<i64: 8, 1>}, {transform_indices = @transform_3, window_bounds = array<i64: 1, 8, 16>}]} {
    %c0 = arith.constant 0 : index
    %c0_0 = arith.constant 0 : index
    %0 = vector.load %arg4[%c0, %c0_0] : memref<8x4xf32, #tpu.memory_space<vmem>>, vector<8x4xf32>
    %c0_1 = arith.constant 0 : index
    %c0_2 = arith.constant 0 : index
    %1 = vector.load %arg5[%c0_1, %c0_2] : memref<8x1xf32, #tpu.memory_space<vmem>>, vector<8x1xf32>
    %2 = vector.shape_cast %1 : vector<8x1xf32> to vector<8x1xf32>
    %3 = vector.broadcast %2 : vector<8x1xf32> to vector<8x16xf32>
    %c0_i32 = arith.constant 0 : i32
    %4 = arith.index_cast %c0_i32 : i32 to index
    %c0_3 = arith.constant 0 : index
    %c0_4 = arith.constant 0 : index
    %5 = vector.load %arg3[%4, %c0_3, %c0_4] : memref<1x4x16xf32, #tpu.memory_space<vmem>>, vector<1x4x16xf32>
    %6 = vector.shape_cast %5 : vector<1x4x16xf32> to vector<4x16xf32>
    %cst = arith.constant dense<0.000000e+00> : vector<8x16xf32>
    %7 = tpu.matmul %0, %6, %cst {dimension_numbers = #tpu.dot_dimension_numbers<[1], [0], [0], [1], [0, 0, 1, 1], [], []>} : vector<8x4xf32>, vector<4x16xf32>, vector<8x16xf32> -> vector<8x16xf32>
    %8 = arith.addf %7, %3 : vector<8x16xf32>
    %9 = arith.index_cast %c0_i32 : i32 to index
    %c0_5 = arith.constant 0 : index
    %c0_6 = arith.constant 0 : index
    %10 = vector.load %arg6[%9, %c0_5, %c0_6] : memref<1x8x16xf32, #tpu.memory_space<vmem>>, vector<1x8x16xf32>
    %11 = vector.shape_cast %10 : vector<1x8x16xf32> to vector<8x16xf32>
    %12 = vector.shape_cast %8 : vector<8x16xf32> to vector<1x8x16xf32>
    tpu.vector_store %arg6[%9, %c0_5, %c0_6], %12 {strides = array<i32>} : memref<1x8x16xf32, #tpu.memory_space<vmem>>, vector<1x8x16xf32>,
    %c1_i32 = arith.constant 1 : i32
    return
  }
  func.func @transform_0(%arg0: i32, %arg1: i32, %arg2: i32) -> (i32, i32, i32) {
    %c0_i32 = arith.constant 0 : i32
    %c0_i32_0 = arith.constant 0 : i32
    return %arg0, %c0_i32, %arg1 : i32, i32, i32
  }
  func.func @transform_1(%arg0: i32, %arg1: i32, %arg2: i32) -> (i32, i32) {
    %c0_i32 = arith.constant 0 : i32
    %c0_i32_0 = arith.constant 0 : i32
    return %arg2, %c0_i32 : i32, i32
  }
  func.func @transform_2(%arg0: i32, %arg1: i32, %arg2: i32) -> (i32, i32) {
    %c0_i32 = arith.constant 0 : i32
    %c0_i32_0 = arith.constant 0 : i32
    return %arg2, %c0_i32 : i32, i32
  }
  func.func @transform_3(%arg0: i32, %arg1: i32, %arg2: i32) -> (i32, i32, i32) {
    %c0_i32 = arith.constant 0 : i32
    return %arg0, %arg2, %arg1 : i32, i32, i32
  }
}

</mosaic_0001>

<llo_original>
// kernel: tpu_custom_call.1
$region0: #{tpu_custom_call.1}
  #allocation0 [shape = 'u32[]', space=smem, size = 0x4, offset = 0x4, fixed_abs, tag = 'smem constant byte address 0x4 - core index']
  #allocation1 [shape = 'u32[72,128]{1,0:T(1,128)}', space=vmem, size = 0x9000, scoped, tag = 'internal scratch']
  %s0 = inlined_call_operand.vmem [shape: f32[2,4,16], index: 0, kind: input, shape index: {}]
  %s1 = inlined_call_operand.vmem [shape: f32[8,4], index: 1, kind: input, shape index: {}]
  %s2 = inlined_call_operand.vmem [shape: f32[8,1], index: 2, kind: input, shape index: {}]
  %s3 = inlined_call_operand.hbm [shape: f32[2,8,16], index: 3, kind: output, shape index: {}]
  %s4 = sld [smem:[#allocation0]]
  $region45: #{tpu_custom_call.1} parent=0
    _
  %s6 = ssub.s32 1, %s4
  %s7 = scalar_select 0, %s6, %s4
  $region1: #{tpu_custom_call.1} parent=0
    #allocation2 [shape = 'u8[8192]{0}', space=vmem, size = 0x2000, scoped, tag = 'output window, operand 0']
    #allocation3 [shape = 's32[2]{0}', space=sflag, size = 0x8, scoped, tag = 'scoped memory for tpu_custom_call.1']
    %8 = vsyncpa [#allocation3], 0
    %s9 = scalar_lea.sflag [#allocation3], 1
    %10 = vsyncpa %s9, 0
    loop: start=0, step=1, limit=4
    $region2: #{tpu_custom_call.1} parent=1 // loop_pre_header
      _
    $region3: #{tpu_custom_call.1} parent=1 // loop_header
      %s12 = sphi 0, %s16
      %p13 = scmp.ge.s32.totalorder %s12, 4
      %s19 = sphi 0, %s38
      %s20 = sphi 0, %s34
      %s21 = sphi 0, %s30
      %s22 = sphi 0, %s19
      %s23 = sphi 0, %s20
      %s24 = sphi 0, %s21
      %s25 = sphi 0, %s22
      %s26 = sphi 0, %s23
      %s27 = sphi 0, %s24
      %s43 = sphi 0, %s45
      %s46 = sphi 0, %s43
      %s47 = sphi 0, %s46
      %s63 = sphi 0, %s47
      %s69 = sphi 0, %s71
      %s72 = sphi 0, %s69
      %s73 = sphi 0, %s72
      %s89 = sphi 0, %s73
      %s95 = sphi 0, %s97
      %s98 = sphi 0, %s95
      %s99 = sphi 0, %s98
      %s115 = sphi 0, %s99
      %s125 = sphi 0, %s127
      %s128 = sphi 0, %s125
      %s129 = sphi 0, %s128
      %s145 = sphi 0, %s129
    $region4: #{tpu_custom_call.1} parent=1 // loop_header_branch
      %15 = sbr.rel (%p13) target = $region8
    $region5: #{tpu_custom_call.1} parent=1 // loop_body
      %s17 = ssub.s32 %s12, 1
      %s18 = ssub.s32 %s12, 2
      %s28 = sadd.s32 1, %s21
      %p29 = scmp.ge.s32.totalorder %s28, 1
      %s30 = scalar_select %p29, 0, %s28
      %s31 = sadd.s32 1, %s20
      %s32 = scalar_select %p29, %s31, %s20
      %p33 = scmp.ge.s32.totalorder %s32, 1
      %s34 = scalar_select %p33, 0, %s32
      %s35 = sadd.s32 1, %s19
      %s36 = scalar_select %p33, %s35, %s19
      %p37 = scmp.ge.s32.totalorder %s36, 2
      %s38 = scalar_select %p37, 0, %s36
      %s39 = ssub.s32 %s19, %s38
      %s40 = ssub.s32 %s20, %s34
      %s41 = sor.u32 %s39, %s40
      %p42 = scmp.eq.s32.totalorder %s41, 0
      %s44 = sadd.s32 %s43, 1
      %s45 = scalar_select %p42, %s43, %s44
      %p48 = pneg %p42
      %p49 = scmp.eq.s32.totalorder %s12, 1
      %p50 = por %p48, %p49
      %p51 = scmp.ne.s32.totalorder %s43, %s46
      %p52 = scmp.eq.s32.totalorder %s12, 0
      %p53 = por %p51, %p52
      %p54 = scmp.ne.s32.totalorder %s43, %s46
      %p55 = scmp.eq.s32.totalorder %s17, 1
      %p56 = por %p54, %p55
      %p57 = scmp.ne.s32.totalorder %s46, %s47
      %p58 = scmp.eq.s32.totalorder %s17, 0
      %p59 = por %p57, %p58
      %p60 = scmp.ne.s32.totalorder %s46, %s47
      %p61 = scmp.eq.s32.totalorder %s18, 1
      %p62 = por %p60, %p61
      %p64 = scmp.ne.s32.totalorder %s47, %s63
      %p65 = scmp.eq.s32.totalorder %s18, 0
      %p66 = por %p64, %p65
      %s67 = ssub.s32 %s21, %s30
      %p68 = scmp.eq.s32.totalorder %s67, 0
      %s70 = sadd.s32 %s69, 1
      %s71 = scalar_select %p68, %s69, %s70
      %p74 = pneg %p68
      %p75 = scmp.eq.s32.totalorder %s12, 1
      %p76 = por %p74, %p75
      %p77 = scmp.ne.s32.totalorder %s69, %s72
      %p78 = scmp.eq.s32.totalorder %s12, 0
      %p79 = por %p77, %p78
      %p80 = scmp.ne.s32.totalorder %s69, %s72
      %p81 = scmp.eq.s32.totalorder %s17, 1
      %p82 = por %p80, %p81
      %p83 = scmp.ne.s32.totalorder %s72, %s73
      %p84 = scmp.eq.s32.totalorder %s17, 0
      %p85 = por %p83, %p84
      %p86 = scmp.ne.s32.totalorder %s72, %s73
      %p87 = scmp.eq.s32.totalorder %s18, 1
      %p88 = por %p86, %p87
      %p90 = scmp.ne.s32.totalorder %s73, %s89
      %p91 = scmp.eq.s32.totalorder %s18, 0
      %p92 = por %p90, %p91
      %s93 = ssub.s32 %s21, %s30
      %p94 = scmp.eq.s32.totalorder %s93, 0
      %s96 = sadd.s32 %s95, 1
      %s97 = scalar_select %p94, %s95, %s96
      %p100 = pneg %p94
      %p101 = scmp.eq.s32.totalorder %s12, 1
      %p102 = por %p100, %p101
      %p103 = scmp.ne.s32.totalorder %s95, %s98
      %p104 = scmp.eq.s32.totalorder %s12, 0
      %p105 = por %p103, %p104
      %p106 = scmp.ne.s32.totalorder %s95, %s98
      %p107 = scmp.eq.s32.totalorder %s17, 1
      %p108 = por %p106, %p107
      %p109 = scmp.ne.s32.totalorder %s98, %s99
      %p110 = scmp.eq.s32.totalorder %s17, 0
      %p111 = por %p109, %p110
      %p112 = scmp.ne.s32.totalorder %s98, %s99
      %p113 = scmp.eq.s32.totalorder %s18, 1
      %p114 = por %p112, %p113
      %p116 = scmp.ne.s32.totalorder %s99, %s115
      %p117 = scmp.eq.s32.totalorder %s18, 0
      %p118 = por %p116, %p117
      %s119 = ssub.s32 %s19, %s38
      %s120 = ssub.s32 %s21, %s30
      %s121 = sor.u32 %s119, %s120
      %s122 = ssub.s32 %s20, %s34
      %s123 = sor.u32 %s121, %s122
      %p124 = scmp.eq.s32.totalorder %s123, 0
      %s126 = sadd.s32 %s125, 1
      %s127 = scalar_select %p124, %s125, %s126
      %p130 = pneg %p124
      %p131 = scmp.eq.s32.totalorder %s12, 1
      %p132 = por %p130, %p131
      %p133 = scmp.ne.s32.totalorder %s125, %s128
      %p134 = scmp.eq.s32.totalorder %s12, 0
      %p135 = por %p133, %p134
      %p136 = scmp.ne.s32.totalorder %s125, %s128
      %p137 = scmp.eq.s32.totalorder %s17, 1
      %p138 = por %p136, %p137
      %p139 = scmp.ne.s32.totalorder %s128, %s129
      %p140 = scmp.eq.s32.totalorder %s17, 0
      %p141 = por %p139, %p140
      %p142 = scmp.ne.s32.totalorder %s128, %s129
      %p143 = scmp.eq.s32.totalorder %s18, 1
      %p144 = por %p142, %p143
      %p146 = scmp.ne.s32.totalorder %s129, %s145
      %p147 = scmp.eq.s32.totalorder %s18, 0
      %p148 = por %p146, %p147
      %p149 = scmp.le.s32.totalorder 1, %s12
      %p150 = scmp.lt.s32.totalorder %s12, 3
      %p151 = pnand %p149, %p150
      %p152 = pneg %p151
      // Predicated region
      $region9: #{tpu_custom_call.1} parent=5 // pred_check
        _
      $region10: #{tpu_custom_call.1} parent=5 // pred_check_branch
        %154 = sbr.rel (%p151) target = $region12
      $region11: #{tpu_custom_call.1} parent=5 // pred_region
        %s155 = ssub.s32 %s12, 1
        // Predicated region
        $region13: #{tpu_custom_call.1} parent=11 // pred_check
          %p156 = pneg %p85
        $region14: #{tpu_custom_call.1} parent=11 // pred_check_branch
          %158 = sbr.rel (%p156) target = $region16
        $region15: #{tpu_custom_call.1} parent=11 // pred_region
          %p159 = scmp.lt.s32.totalorder %s24, 0
          %s160 = scalar_select %p159, %s24, 0
          %s161 = smul.addr %s160, 8
          %s162 = scalar_lea.vmem %s1, %s161
        $region16: #{tpu_custom_call.1} parent=11 // pred_fallthru
          _
        // Predicated region
        $region17: #{tpu_custom_call.1} parent=11 // pred_check
          %p163 = pneg %p111
        $region18: #{tpu_custom_call.1} parent=11 // pred_check_branch
          %165 = sbr.rel (%p163) target = $region20
        $region19: #{tpu_custom_call.1} parent=11 // pred_region
          %p166 = scmp.lt.s32.totalorder %s24, 0
          %s167 = scalar_select %p166, %s24, 0
          %s168 = smul.addr %s167, 8
          %s169 = scalar_lea.vmem %s2, %s168
        $region20: #{tpu_custom_call.1} parent=11 // pred_fallthru
          _
      $region12: #{tpu_custom_call.1} parent=5 // pred_fallthru
        _
      %p170 = scmp.lt.s32.totalorder %s12, 2
      // Predicated region
      $region21: #{tpu_custom_call.1} parent=5 // pred_check
        %p171 = pneg %p170
      $region22: #{tpu_custom_call.1} parent=5 // pred_check_branch
        %173 = sbr.rel (%p171) target = $region24
      $region23: #{tpu_custom_call.1} parent=5 // pred_region
        // Predicated region
        $region25: #{tpu_custom_call.1} parent=23 // pred_check
          %p174 = pneg %p53
        $region26: #{tpu_custom_call.1} parent=23 // pred_check_branch
          %176 = sbr.rel (%p174) target = $region28
        $region27: #{tpu_custom_call.1} parent=23 // pred_region
          %p177 = scmp.lt.s32.totalorder %s19, 1
          %s178 = scalar_select %p177, %s19, 1
          %p179 = scmp.lt.s32.totalorder %s20, 0
          %s180 = scalar_select %p179, %s20, 0
          %s181 = sadd.s32 %s180, %s178
          %s182 = smul.addr %s181, 4
          %s183 = scalar_lea.vmem %s0, %s182
        $region28: #{tpu_custom_call.1} parent=23 // pred_fallthru
          _
      $region24: #{tpu_custom_call.1} parent=5 // pred_fallthru
        _
      %p184 = scmp.le.s32.totalorder 1, %s12
      %p185 = scmp.lt.s32.totalorder %s12, 3
      %p186 = pnand %p184, %p185
      %p187 = pneg %p186
      // Predicated region
      $region29: #{tpu_custom_call.1} parent=5 // pred_check
        _
      $region30: #{tpu_custom_call.1} parent=5 // pred_check_branch
        %189 = sbr.rel (%p186) target = $region32
      $region31: #{tpu_custom_call.1} parent=5 // pred_region
        %s190 = ssub.s32 %s12, 1
        %p191 = scmp.lt.s32.totalorder %s22, 1
        %s192 = scalar_select %p191, %s22, 1
        %p193 = scmp.lt.s32.totalorder %s23, 0
        %s194 = scalar_select %p193, %s23, 0
        %s195 = sadd.s32 %s194, %s192
        %s196 = smul.addr %s195, 4
        %s197 = scalar_lea.vmem %s0, %s196
        %p198 = pneg %p59
        %p199 = pneg %p56
        %p200 = scmp.lt.s32.totalorder %s24, 0
        %s201 = scalar_select %p200, %s24, 0
        %s202 = smul.addr %s201, 8
        %s203 = scalar_lea.vmem %s1, %s202
        %p204 = pneg %p85
        %p205 = pneg %p82
        %p206 = scmp.lt.s32.totalorder %s24, 0
        %s207 = scalar_select %p206, %s24, 0
        %s208 = smul.addr %s207, 8
        %s209 = scalar_lea.vmem %s2, %s208
        %p210 = pneg %p111
        %p211 = pneg %p108
        %p212 = pneg %p141
        %p213 = pneg %p138
        %s214 = sand.u32 %s128, 1
        %s215 = scalar_lea.sflag [#allocation3], %s214
        %s216 = sand.u32 %s128, 1
        %s217 = smul.addr %s216, 8
        %s218 = scalar_lea.vmem [#allocation2], %s217
        %p219 = scmp.lt.s32.totalorder %s22, 1
        %s220 = scalar_select %p219, %s22, 1
        %p221 = scmp.lt.s32.totalorder %s23, 0
        %s222 = scalar_select %p221, %s23, 0
        %s223 = sadd.s32 %s222, %s220
        %s224 = smul.addr %s223, 4
        %s225 = scalar_lea.vmem %s0, %s224
        %p226 = scmp.lt.s32.totalorder %s24, 0
        %s227 = scalar_select %p226, %s24, 0
        %s228 = smul.addr %s227, 8
        %s229 = scalar_lea.vmem %s1, %s228
        %p230 = scmp.lt.s32.totalorder %s24, 0
        %s231 = scalar_select %p230, %s24, 0
        %s232 = smul.addr %s231, 8
        %s233 = scalar_lea.vmem %s2, %s232
        %v234 = vld [vmem:[%s229] sm:$0xff]
        %v235 = vld [vmem:[%s233] sm:$0xff]
        %237 = vset.pattern.permute.xlu0 0
        %238 = vperm.xlu0 %237, %v235
        %v239 = vpop.permute.xlu0 %238
        %v241 = vld [vmem:[%s225] sm:$0xf]
        %vm242 = vcmask 31744
        %v244 = vsel %vm242, %v234, 0
        %vm246 = vcmask 1043456
        %v248 = vsel %vm246, %v241, 0
        %250 = vmatpush.msra.mxu0 0.0
        %251 = vmatpush.msra.mxu0 0.0
        %252 = vmatpush.msra.mxu0 0.0
        %253 = vmatpush.msra.mxu0 0.0
        %254 = vmatpush.msra.mxu0 0.0
        %255 = vmatpush.msra.mxu0 0.0
        %256 = vmatpush.msra.mxu0 0.0
        %257 = vmatpush.msra.mxu0 0.0
        %258 = vmatpush.msra.mxu0 0.0
        %259 = vmatpush.msra.mxu0 0.0
        %260 = vmatpush.msra.mxu0 0.0
        %261 = vmatpush.msra.mxu0 0.0
        %262 = vmatpush.msra.mxu0 0.0
        %263 = vmatpush.msra.mxu0 0.0
        %264 = vmatpush.msra.mxu0 0.0
        %265 = vmatpush.msra.mxu0 %v248
        %266 = vmatmul.f32.gmra.mxu0 %v244
        %v267 = vpop.f32.mrf.mxu0
        %v268 = vadd.f32 %v239, %v267
        %269 = vdwg.mxu0
        %vm270 = vcmask 130048
        %271 = vst.msk [vmem:[%s218] sm:$0xff] %vm270, %v268
        %s272 = sand.u32 %s128, 1
        %s273 = scalar_lea.sflag [#allocation3], %s272
        %s274 = sand.u32 %s128, 1
        %s275 = smul.addr %s274, 8
        %s276 = scalar_lea.vmem [#allocation2], %s275
        // Predicated region
        $region33: #{tpu_custom_call.1} parent=31 // pred_check
          %p277 = pneg %p138
        $region34: #{tpu_custom_call.1} parent=31 // pred_check_branch
          %279 = sbr.rel (%p277) target = $region36
        $region35: #{tpu_custom_call.1} parent=31 // pred_region
          %281 = vsyncadd %s273, 0
          %s282 = sadd.s32 %s23, %s24
          %s283 = sadd.s32 %s282, %s22
          %s284 = smul.addr %s283, 8
          %s285 = scalar_lea.hbm %s3, %s284
          %s287 = sshll.u32 %s276, 4
          %s288 = int_to_ptr.vmem [resolvable:$true] %s287
          %s289 = sshll.u32 %s285, 4
          %s290 = int_to_ptr.hbm [resolvable:$true] %s289
          %292 = dma.vmem_to_hbm [thread:$0]  %s288, 128, %s290, %s273
        $region36: #{tpu_custom_call.1} parent=31 // pred_fallthru
          _
      $region32: #{tpu_custom_call.1} parent=5 // pred_fallthru
        _
      %p293 = scmp.le.s32.totalorder 2, %s12
      // Predicated region
      $region37: #{tpu_custom_call.1} parent=5 // pred_check
        %p294 = pneg %p293
      $region38: #{tpu_custom_call.1} parent=5 // pred_check_branch
        %296 = sbr.rel (%p294) target = $region40
      $region39: #{tpu_custom_call.1} parent=5 // pred_region
        %s297 = ssub.s32 %s12, 2
        // Predicated region
        $region41: #{tpu_custom_call.1} parent=39 // pred_check
          %p298 = pneg %p144
        $region42: #{tpu_custom_call.1} parent=39 // pred_check_branch
          %300 = sbr.rel (%p298) target = $region44
        $region43: #{tpu_custom_call.1} parent=39 // pred_region
          %s301 = sand.u32 %s129, 1
          %s302 = scalar_lea.sflag [#allocation3], %s301
          %s303 = sand.u32 %s129, 1
          %s304 = smul.addr %s303, 8
          %s305 = scalar_lea.vmem [#allocation2], %s304
          %307 = dma.done %s302, 128
        $region44: #{tpu_custom_call.1} parent=39 // pred_fallthru
          _
      $region40: #{tpu_custom_call.1} parent=5 // pred_fallthru
        _
    $region6: #{tpu_custom_call.1} parent=1 // loop_footer
      %s16 = sadd.s32 1, %s12
    $region7: #{tpu_custom_call.1} parent=1 // loop_footer_branch
      %11 = sbr.rel target = $region3
    $region8: #{tpu_custom_call.1} parent=1 // loop_exit
      _
    %308 = vsyncpa [#allocation3], 1
    %s309 = scalar_lea.sflag [#allocation3], 1
    %310 = vsyncpa %s309, 1

</llo_original>
